<compile_context>
chip_gen: v6e
topology: v6e:2x2x1
jax: 0.10.0
libtpu: 0.0.40
codegen_flags: <defaults>
</compile_context>

<pallas_src>
import functools

import jax
import jax.numpy as jnp
from jax.experimental import pallas as pl
from jax.experimental.pallas import tpu as pltpu


def _round_up(x: int, m: int) -> int:
    return (x + m - 1) // m * m


def _pad2d(a, rows: int, cols: int):
    pr, pc = rows - a.shape[0], cols - a.shape[1]
    if pr or pc:
        a = jnp.pad(a, ((0, pr), (0, pc)))
    return a


def _film_kernel(*refs, cond_predict_scale: bool):
    if cond_predict_scale:
        x_ref, w_ref, bfc_ref, scale_ref, bias_ref, o_ref, acc_ref = refs
    else:
        x_ref, w_ref, bfc_ref, bias_ref, o_ref, acc_ref = refs
        scale_ref = None

    k = pl.program_id(2)

    @pl.when(k == 0)
    def _():
        acc_ref[...] = jnp.zeros_like(acc_ref)

    acc_ref[...] += jnp.dot(x_ref[...], w_ref[...],
                            preferred_element_type=jnp.float32)

    @pl.when(k == pl.num_programs(2) - 1)
    def _():
        out = acc_ref[...] + bfc_ref[...].astype(jnp.float32)   # (tm, tn) + (1, tn)
        if cond_predict_scale:
            out = scale_ref[...].astype(jnp.float32) * out \
                + bias_ref[...].astype(jnp.float32)
        else:
            out = out + bias_ref[...].astype(jnp.float32)
        o_ref[...] = out.astype(o_ref.dtype)


def conditional_film_layer(x, cond, w_fc, b_fc, w_ce, b_ce, *, cond_predict_scale: bool):
    """x: [B, T, Din], cond: [B, Dcond]; w_fc: [Din, Dout], b_fc: [1, Dout];
    w_ce: [Dcond, Dce], b_ce: [1, Dce] where Dce = 2*Dout if cond_predict_scale else Dout."""
    B, T, Din = x.shape
    Dout = w_fc.shape[1]
    M = B * T

    # --- cond_encoder hoisted out of the kernel (tiny; EUP-heavy) ------------------
    # Numerically stable softplus: max(x,0) + log1p(exp(-|x|)); Mish(x) = x*tanh(softplus(x)).
    sp = jnp.maximum(cond, 0.0) + jnp.log1p(jnp.exp(-jnp.abs(cond)))
    mish = cond * jnp.tanh(sp)
    embed = mish @ w_ce + b_ce.reshape(-1)                      # [B, Dce]
    if cond_predict_scale:
        scale_b, bias_b = embed[:, :Dout], embed[:, Dout:]      # torch chunk(2, dim=-1) order
    else:
        scale_b, bias_b = None, embed

    # Expand per-batch FiLM params to per-row of the flattened [B*T, ...] problem.
    bias_rows = jnp.repeat(bias_b, T, axis=0)                   # [M, Dout]
    scale_rows = jnp.repeat(scale_b, T, axis=0) if cond_predict_scale else None

    # --- tiling / padding so everything is (8,128)-aligned and output is lane-dense ---
    tile_m = 256 if M >= 256 else _round_up(M, 8)
    tile_n = 256 if Dout >= 256 else 128
    tile_k = 512 if Din >= 512 else 128
    Mp = _round_up(M, tile_m)
    Np = _round_up(Dout, tile_n)
    Kp = _round_up(Din, tile_k)

    x2 = _pad2d(x.reshape(M, Din), Mp, Kp)
    w2 = _pad2d(w_fc, Kp, Np)
    bfc2 = _pad2d(b_fc.reshape(1, -1), 1, Np)
    bias2 = _pad2d(bias_rows, Mp, Np)

    inputs = [x2, w2, bfc2]
    in_specs = [
        pl.BlockSpec((tile_m, tile_k), lambda i, j, k: (i, k)),   # x tile
        pl.BlockSpec((tile_k, tile_n), lambda i, j, k: (k, j)),   # fc weight tile
        pl.BlockSpec((1, tile_n), lambda i, j, k: (0, j)),        # fc bias
    ]
    if cond_predict_scale:
        scale2 = _pad2d(scale_rows, Mp, Np)
        inputs.append(scale2)
        in_specs.append(pl.BlockSpec((tile_m, tile_n), lambda i, j, k: (i, j)))
    inputs.append(bias2)
    in_specs.append(pl.BlockSpec((tile_m, tile_n), lambda i, j, k: (i, j)))

    grid = (Mp // tile_m, Np // tile_n, Kp // tile_k)
    kernel = functools.partial(_film_kernel, cond_predict_scale=cond_predict_scale)

    itemsize = jnp.dtype(x.dtype).itemsize
    bytes_accessed = itemsize * (x2.size + w2.size + bfc2.size + bias2.size + Mp * Np)
    if cond_predict_scale:
        bytes_accessed += itemsize * bias2.size
    cost = pl.CostEstimate(flops=2 * M * Din * Dout,
                           transcendentals=0,
                           bytes_accessed=int(bytes_accessed))

    out = pl.pallas_call(
        kernel,
        out_shape=jax.ShapeDtypeStruct((Mp, Np), x.dtype),
        grid_spec=pltpu.PrefetchScalarGridSpec(
            num_scalar_prefetch=0,
            grid=grid,
            in_specs=in_specs,
            out_specs=pl.BlockSpec((tile_m, tile_n), lambda i, j, k: (i, j)),
            scratch_shapes=[pltpu.VMEM((tile_m, tile_n), jnp.float32)]),
        compiler_params=pltpu.CompilerParams(
            dimension_semantics=("parallel", "parallel", "arbitrary")),
        cost_estimate=cost,
    )(*inputs)

    return out[:M, :Dout].reshape(B, T, Dout)


def _reference(x, cond, w_fc, b_fc, w_ce, b_ce, *, cond_predict_scale: bool):
    out = jnp.einsum("btd,de->bte", x, w_fc) + b_fc[0]
    sp = jnp.maximum(cond, 0.0) + jnp.log1p(jnp.exp(-jnp.abs(cond)))
    mish = cond * jnp.tanh(sp)
    embed = mish @ w_ce + b_ce[0]                     # [B, Dce]
    embed = embed[:, None, :]                         # unsqueeze(1), broadcasts over T
    if cond_predict_scale:
        dout = w_fc.shape[1]
        scale, bias = embed[..., :dout], embed[..., dout:]
        return scale * out + bias
    return out + embed


if __name__ == "__main__":
    B, T = 2, 8
    input_dim, output_dim, cond_dim = 32, 32, 16

    key = jax.random.PRNGKey(0)
    kx, kc, k1, k2, k3, k4 = jax.random.split(key, 6)

    x = jax.random.normal(kx, (B, T, input_dim), dtype=jnp.float32)
    cond = jax.random.normal(kc, (B, cond_dim), dtype=jnp.float32)

    bound_fc = 1.0 / jnp.sqrt(input_dim)
    w_fc = jax.random.uniform(k1, (input_dim, output_dim), jnp.float32, -bound_fc, bound_fc)
    b_fc = jax.random.uniform(k2, (1, output_dim), jnp.float32, -bound_fc, bound_fc)
    bound_ce = 1.0 / jnp.sqrt(cond_dim)

    ok = True
    for cond_predict_scale in (True, False):
        d_ce = output_dim * 2 if cond_predict_scale else output_dim
        w_ce = jax.random.uniform(k3, (cond_dim, d_ce), jnp.float32, -bound_ce, bound_ce)
        b_ce = jax.random.uniform(k4, (1, d_ce), jnp.float32, -bound_ce, bound_ce)

        out = conditional_film_layer(
            x, cond, w_fc, b_fc, w_ce, b_ce, cond_predict_scale=cond_predict_scale)
        out = jax.block_until_ready(out)

        ref = _reference(x, cond, w_fc, b_fc, w_ce, b_ce,
                         cond_predict_scale=cond_predict_scale)
        assert out.shape == (B, T, output_dim)
        ok &= bool(jnp.allclose(out, ref, atol=1e-5, rtol=1e-5))

    assert ok, "mismatch vs reference"
    print("KERNEL_OK")
</pallas_src>

<mosaic_0001>
module attributes {stable_mosaic.version = 11 : i64} {
  func.func @_film_kernel(%arg0: i32, %arg1: i32, %arg2: i32, %arg3: memref<16x128xf32, #tpu.memory_space<vmem>>, %arg4: memref<128x128xf32, #tpu.memory_space<vmem>>, %arg5: memref<1x128xf32, #tpu.memory_space<vmem>>, %arg6: memref<16x128xf32, #tpu.memory_space<vmem>>, %arg7: memref<16x128xf32, #tpu.memory_space<vmem>>, %arg8: memref<16x128xf32, #tpu.memory_space<vmem>>, %arg9: memref<16x128xf32, #tpu.memory_space<vmem>>) attributes {dimension_semantics = [#tpu.dimension_semantics<parallel>, #tpu.dimension_semantics<parallel>, #tpu.dimension_semantics<arbitrary>], iteration_bounds = array<i64: 1, 1, 1>, scalar_prefetch = 0 : i64, scratch_operands = 1 : i64, tpu.core_type = #tpu.core_type<tc>, window_params = [{transform_indices = @transform_0, window_bounds = array<i64: 16, 128>}, {transform_indices = @transform_1, window_bounds = array<i64: 128, 128>}, {transform_indices = @transform_2, window_bounds = array<i64: 1, 128>}, {transform_indices = @transform_3, window_bounds = array<i64: 16, 128>}, {transform_indices = @transform_4, window_bounds = array<i64: 16, 128>}, {transform_indices = @transform_5, window_bounds = array<i64: 16, 128>}]} {
    %c0_i32 = arith.constant 0 : i32
    %0 = arith.cmpi eq, %arg2, %c0_i32 : i32
    %1 = arith.extui %0 : i1 to i32
    %c0_i32_0 = arith.constant 0 : i32
    %2 = arith.cmpi ne, %1, %c0_i32_0 : i32
    scf.if %2 {
      %cst_10 = arith.constant 0.000000e+00 : f32
      %12 = vector.broadcast %cst_10 : f32 to vector<16x128xf32>
      %c0_11 = arith.constant 0 : index
      %c0_12 = arith.constant 0 : index
      %13 = vector.load %arg9[%c0_11, %c0_12] : memref<16x128xf32, #tpu.memory_space<vmem>>, vector<16x128xf32>
      tpu.vector_store %arg9[%c0_11, %c0_12], %12 {strides = array<i32>} : memref<16x128xf32, #tpu.memory_space<vmem>>, vector<16x128xf32>,
    } else {
    }
    %c0 = arith.constant 0 : index
    %c0_1 = arith.constant 0 : index
    %3 = vector.load %arg9[%c0, %c0_1] : memref<16x128xf32, #tpu.memory_space<vmem>>, vector<16x128xf32>
    %c0_2 = arith.constant 0 : index
    %c0_3 = arith.constant 0 : index
    %4 = vector.load %arg3[%c0_2, %c0_3] : memref<16x128xf32, #tpu.memory_space<vmem>>, vector<16x128xf32>
    %c0_4 = arith.constant 0 : index
    %c0_5 = arith.constant 0 : index
    %5 = vector.load %arg4[%c0_4, %c0_5] : memref<128x128xf32, #tpu.memory_space<vmem>>, vector<128x128xf32>
    %cst = arith.constant dense<0.000000e+00> : vector<16x128xf32>
    %6 = tpu.matmul %4, %5, %cst {dimension_numbers = #tpu.dot_dimension_numbers<[1], [0], [0], [1], [0, 0, 1, 1], [], []>} : vector<16x128xf32>, vector<128x128xf32>, vector<16x128xf32> -> vector<16x128xf32>
    %7 = arith.addf %3, %6 : vector<16x128xf32>
    %c0_6 = arith.constant 0 : index
    %c0_7 = arith.constant 0 : index
    %8 = vector.load %arg9[%c0_6, %c0_7] : memref<16x128xf32, #tpu.memory_space<vmem>>, vector<16x128xf32>
    tpu.vector_store %arg9[%c0_6, %c0_7], %7 {strides = array<i32>} : memref<16x128xf32, #tpu.memory_space<vmem>>, vector<16x128xf32>,
    %c0_i32_8 = arith.constant 0 : i32
    %9 = arith.cmpi eq, %arg2, %c0_i32_8 : i32
    %10 = arith.extui %9 : i1 to i32
    %c0_i32_9 = arith.constant 0 : i32
    %11 = arith.cmpi ne, %10, %c0_i32_9 : i32
    scf.if %11 {
      %c0_10 = arith.constant 0 : index
      %c0_11 = arith.constant 0 : index
      %12 = vector.load %arg9[%c0_10, %c0_11] : memref<16x128xf32, #tpu.memory_space<vmem>>, vector<16x128xf32>
      %c0_12 = arith.constant 0 : index
      %c0_13 = arith.constant 0 : index
      %13 = vector.load %arg5[%c0_12, %c0_13] : memref<1x128xf32, #tpu.memory_space<vmem>>, vector<1x128xf32>
      %14 = vector.broadcast %13 : vector<1x128xf32> to vector<16x128xf32>
      %15 = arith.addf %12, %14 : vector<16x128xf32>
      %c0_14 = arith.constant 0 : index
      %c0_15 = arith.constant 0 : index
      %16 = vector.load %arg6[%c0_14, %c0_15] : memref<16x128xf32, #tpu.memory_space<vmem>>, vector<16x128xf32>
      %17 = arith.mulf %16, %15 : vector<16x128xf32>
      %c0_16 = arith.constant 0 : index
      %c0_17 = arith.constant 0 : index
      %18 = vector.load %arg7[%c0_16, %c0_17] : memref<16x128xf32, #tpu.memory_space<vmem>>, vector<16x128xf32>
      %19 = arith.addf %17, %18 : vector<16x128xf32>
      %c0_18 = arith.constant 0 : index
      %c0_19 = arith.constant 0 : index
      %20 = vector.load %arg8[%c0_18, %c0_19] : memref<16x128xf32, #tpu.memory_space<vmem>>, vector<16x128xf32>
      tpu.vector_store %arg8[%c0_18, %c0_19], %19 {strides = array<i32>} : memref<16x128xf32, #tpu.memory_space<vmem>>, vector<16x128xf32>,
    } else {
    }
    return
  }
  func.func @transform_0(%arg0: i32, %arg1: i32, %arg2: i32) -> (i32, i32) {
    %c0_i32 = arith.constant 0 : i32
    return %arg0, %arg2 : i32, i32
  }
  func.func @transform_1(%arg0: i32, %arg1: i32, %arg2: i32) -> (i32, i32) {
    %c0_i32 = arith.constant 0 : i32
    return %arg2, %arg1 : i32, i32
  }
  func.func @transform_2(%arg0: i32, %arg1: i32, %arg2: i32) -> (i32, i32) {
    %c0_i32 = arith.constant 0 : i32
    %c0_i32_0 = arith.constant 0 : i32
    return %c0_i32, %arg1 : i32, i32
  }
  func.func @transform_3(%arg0: i32, %arg1: i32, %arg2: i32) -> (i32, i32) {
    %c0_i32 = arith.constant 0 : i32
    return %arg0, %arg1 : i32, i32
  }
  func.func @transform_4(%arg0: i32, %arg1: i32, %arg2: i32) -> (i32, i32) {
    %c0_i32 = arith.constant 0 : i32
    return %arg0, %arg1 : i32, i32
  }
  func.func @transform_5(%arg0: i32, %arg1: i32, %arg2: i32) -> (i32, i32) {
    %c0_i32 = arith.constant 0 : i32
    return %arg0, %arg1 : i32, i32
  }
}

</mosaic_0001>

<llo_original>
// kernel: tpu_custom_call.1
$region0: #{tpu_custom_call.1}
  #allocation0 [shape = 'u32[]', space=smem, size = 0x4, offset = 0x4, fixed_abs, tag = 'smem constant byte address 0x4 - core index']
  #allocation1 [shape = 'u32[144,128]{1,0:T(1,128)}', space=vmem, size = 0x12000, scoped, tag = 'internal scratch']
  #allocation2 [shape = 'f32[16,128]{1,0:T(8,128)}', space=vmem, size = 0x2000, scoped, tag = 'scratch operand']
  %s0 = inlined_call_operand.hbm [shape: f32[16,128], index: 0, kind: input, shape index: {}]
  %s1 = inlined_call_operand.hbm [shape: f32[128,128], index: 1, kind: input, shape index: {}]
  %s2 = inlined_call_operand.vmem [shape: f32[1,128], index: 2, kind: input, shape index: {}]
  %s3 = inlined_call_operand.hbm [shape: f32[16,128], index: 3, kind: input, shape index: {}]
  %s4 = inlined_call_operand.hbm [shape: f32[16,128], index: 4, kind: input, shape index: {}]
  %s5 = inlined_call_operand.hbm [shape: f32[16,128], index: 5, kind: output, shape index: {}]
  %s6 = sld [smem:[#allocation0]]
  $region54: #{tpu_custom_call.1} parent=0
    _
  %s8 = ssub.s32 1, %s6
  %s9 = scalar_select 0, %s8, %s6
  $region1: #{tpu_custom_call.1} parent=0
    #allocation3 [shape = 'u8[8192]{0}', space=vmem, size = 0x2000, scoped, tag = 'input window, operand 0, single buffered']
    #allocation4 [shape = 's32[1]{0}', space=sflag, size = 0x4, scoped, tag = 'scoped memory for tpu_custom_call.1']
    #allocation5 [shape = 's32[1]{0}', space=sflag, size = 0x4, scoped, tag = 'scoped memory for tpu_custom_call.1']
    #allocation6 [shape = 'u8[65536]{0}', space=vmem, size = 0x10000, scoped, tag = 'input window, operand 1, single buffered']
    #allocation7 [shape = 's32[1]{0}', space=sflag, size = 0x4, scoped, tag = 'scoped memory for tpu_custom_call.1']
    #allocation8 [shape = 'u8[8192]{0}', space=vmem, size = 0x2000, scoped, tag = 'input window, operand 3, single buffered']
    #allocation9 [shape = 'u8[8192]{0}', space=vmem, size = 0x2000, scoped, tag = 'input window, operand 4, single buffered']
    #allocation10 [shape = 's32[1]{0}', space=sflag, size = 0x4, scoped, tag = 'scoped memory for tpu_custom_call.1']
    #allocation11 [shape = 'u8[8192]{0}', space=vmem, size = 0x2000, scoped, tag = 'output window, operand 0, single buffered']
    %10 = vsyncpa [#allocation4], 0
    %11 = vsyncpa [#allocation7], 0
    %12 = vsyncpa [#allocation10], 0
    %13 = vsyncpa [#allocation5], 0
    // Predicated region
    $region2: #{tpu_custom_call.1} parent=1 // pred_check
      _
    $region3: #{tpu_custom_call.1} parent=1 // pred_check_branch
      %15 = sbr.rel (0) target = $region5
    $region4: #{tpu_custom_call.1} parent=1 // pred_region
      %s17 = ssub.s32 256, 256
      %18 = vsyncadd [#allocation4], %s17
      %s19 = sshll.u32 [#allocation3], 4
      %s20 = int_to_ptr.vmem [resolvable:$true] %s19
      %25 = dma.hbm_to_vmem [thread:$0]  %s0, 256, %s20, [#allocation4], 128, 128, 8
    $region5: #{tpu_custom_call.1} parent=1 // pred_fallthru
      _
    // Predicated region
    $region6: #{tpu_custom_call.1} parent=1 // pred_check
      _
    $region7: #{tpu_custom_call.1} parent=1 // pred_check_branch
      %27 = sbr.rel (0) target = $region9
    $region8: #{tpu_custom_call.1} parent=1 // pred_region
      %s29 = ssub.s32 2048, 2048
      %30 = vsyncadd [#allocation7], %s29
      %s31 = sshll.u32 [#allocation6], 4
      %s32 = int_to_ptr.vmem [resolvable:$true] %s31
      %37 = dma.hbm_to_vmem [thread:$0]  %s1, 2048, %s32, [#allocation7], 128, 128, 8
    $region9: #{tpu_custom_call.1} parent=1 // pred_fallthru
      _
    // Predicated region
    $region10: #{tpu_custom_call.1} parent=1 // pred_check
      _
    $region11: #{tpu_custom_call.1} parent=1 // pred_check_branch
      %39 = sbr.rel (0) target = $region13
    $region12: #{tpu_custom_call.1} parent=1 // pred_region
      _
    $region13: #{tpu_custom_call.1} parent=1 // pred_fallthru
      _
    // Predicated region
    $region14: #{tpu_custom_call.1} parent=1 // pred_check
      _
    $region15: #{tpu_custom_call.1} parent=1 // pred_check_branch
      %41 = sbr.rel (0) target = $region17
    $region16: #{tpu_custom_call.1} parent=1 // pred_region
      %s43 = ssub.s32 256, 256
      %44 = vsyncadd [#allocation7], %s43
      %s45 = sshll.u32 [#allocation8], 4
      %s46 = int_to_ptr.vmem [resolvable:$true] %s45
      %51 = dma.hbm_to_vmem [thread:$0]  %s3, 256, %s46, [#allocation7], 128, 128, 8
    $region17: #{tpu_custom_call.1} parent=1 // pred_fallthru
      _
    // Predicated region
    $region18: #{tpu_custom_call.1} parent=1 // pred_check
      _
    $region19: #{tpu_custom_call.1} parent=1 // pred_check_branch
      %53 = sbr.rel (0) target = $region21
    $region20: #{tpu_custom_call.1} parent=1 // pred_region
      %s55 = ssub.s32 256, 256
      %56 = vsyncadd [#allocation10], %s55
      %s57 = sshll.u32 [#allocation9], 4
      %s58 = int_to_ptr.vmem [resolvable:$true] %s57
      %63 = dma.hbm_to_vmem [thread:$0]  %s4, 256, %s58, [#allocation10], 128, 128, 8
    $region21: #{tpu_custom_call.1} parent=1 // pred_fallthru
      _
    // Predicated region
    $region22: #{tpu_custom_call.1} parent=1 // pred_check
      _
    $region23: #{tpu_custom_call.1} parent=1 // pred_check_branch
      %65 = sbr.rel (0) target = $region25
    $region24: #{tpu_custom_call.1} parent=1 // pred_region
      %66 = dma.done [#allocation4], 256
    $region25: #{tpu_custom_call.1} parent=1 // pred_fallthru
      _
    // Predicated region
    $region26: #{tpu_custom_call.1} parent=1 // pred_check
      _
    $region27: #{tpu_custom_call.1} parent=1 // pred_check_branch
      %68 = sbr.rel (0) target = $region29
    $region28: #{tpu_custom_call.1} parent=1 // pred_region
      %69 = dma.done [#allocation7], 2048
    $region29: #{tpu_custom_call.1} parent=1 // pred_fallthru
      _
    // Predicated region
    $region30: #{tpu_custom_call.1} parent=1 // pred_check
      _
    $region31: #{tpu_custom_call.1} parent=1 // pred_check_branch
      %71 = sbr.rel (0) target = $region33
    $region32: #{tpu_custom_call.1} parent=1 // pred_region
      %72 = dma.done [#allocation7], 256
    $region33: #{tpu_custom_call.1} parent=1 // pred_fallthru
      _
    // Predicated region
    $region34: #{tpu_custom_call.1} parent=1 // pred_check
      _
    $region35: #{tpu_custom_call.1} parent=1 // pred_check_branch
      %74 = sbr.rel (0) target = $region37
    $region36: #{tpu_custom_call.1} parent=1 // pred_region
      %75 = dma.done [#allocation10], 256
    $region37: #{tpu_custom_call.1} parent=1 // pred_fallthru
      _
    %p76 = scmp.eq.s32.totalorder 0, 0
    // Predicated region
    $region38: #{tpu_custom_call.1} parent=1 // pred_check
      %p77 = pneg %p76
    $region39: #{tpu_custom_call.1} parent=1 // pred_check_branch
      %79 = sbr.rel (%p77) target = $region41
    $region40: #{tpu_custom_call.1} parent=1 // pred_region
      %80 = vst [vmem:[#allocation2] sm:$0xff] 0.0
      %81 = vst [vmem:[#allocation2 + $0x8] sm:$0xff] 0.0
    $region41: #{tpu_custom_call.1} parent=1 // pred_fallthru
      _
    %v82 = vld [vmem:[#allocation2] sm:$0xff]
    %v83 = vld [vmem:[#allocation2 + $0x8] sm:$0xff]
    %v84 = vld [vmem:[#allocation3] sm:$0xff]
    %v85 = vld [vmem:[#allocation3 + $0x8] sm:$0xff]
    %v86 = vld [vmem:[#allocation6] sm:$0xff]
    %v87 = vld [vmem:[#allocation6 + $0x8] sm:$0xff]
    %v88 = vld [vmem:[#allocation6 + $0x10] sm:$0xff]
    %v89 = vld [vmem:[#allocation6 + $0x18] sm:$0xff]
    %v90 = vld [vmem:[#allocation6 + $0x20] sm:$0xff]
    %v91 = vld [vmem:[#allocation6 + $0x28] sm:$0xff]
    %v92 = vld [vmem:[#allocation6 + $0x30] sm:$0xff]
    %v93 = vld [vmem:[#allocation6 + $0x38] sm:$0xff]
    %v94 = vld [vmem:[#allocation6 + $0x40] sm:$0xff]
    %v95 = vld [vmem:[#allocation6 + $0x48] sm:$0xff]
    %v96 = vld [vmem:[#allocation6 + $0x50] sm:$0xff]
    %v97 = vld [vmem:[#allocation6 + $0x58] sm:$0xff]
    %v98 = vld [vmem:[#allocation6 + $0x60] sm:$0xff]
    %v99 = vld [vmem:[#allocation6 + $0x68] sm:$0xff]
    %v100 = vld [vmem:[#allocation6 + $0x70] sm:$0xff]
    %v101 = vld [vmem:[#allocation6 + $0x78] sm:$0xff]
    %102 = vmatprep.subr.mxu0 0.0
    %103 = vmatpush1.msra.mxu0 %v101
    %104 = vmatprep.subr.mxu0 0.0
    %105 = vmatpush1.msra.mxu0 %v100
    %106 = vmatprep.subr.mxu0 0.0
    %107 = vmatpush1.msra.mxu0 %v99
    %108 = vmatprep.subr.mxu0 0.0
    %109 = vmatpush1.msra.mxu0 %v98
    %110 = vmatprep.subr.mxu0 0.0
    %111 = vmatpush1.msra.mxu0 %v97
    %112 = vmatprep.subr.mxu0 0.0
    %113 = vmatpush1.msra.mxu0 %v96
    %114 = vmatprep.subr.mxu0 0.0
    %115 = vmatpush1.msra.mxu0 %v95
    %116 = vmatprep.subr.mxu0 0.0
    %117 = vmatpush1.msra.mxu0 %v94
    %118 = vmatprep.subr.mxu0 0.0
    %119 = vmatpush1.msra.mxu0 %v93
    %120 = vmatprep.subr.mxu0 0.0
    %121 = vmatpush1.msra.mxu0 %v92
    %122 = vmatprep.subr.mxu0 0.0
    %123 = vmatpush1.msra.mxu0 %v91
    %124 = vmatprep.subr.mxu0 0.0
    %125 = vmatpush1.msra.mxu0 %v90
    %126 = vmatprep.subr.mxu0 0.0
    %127 = vmatpush1.msra.mxu0 %v89
    %128 = vmatprep.subr.mxu0 0.0
    %129 = vmatpush1.msra.mxu0 %v88
    %130 = vmatprep.subr.mxu0 0.0
    %131 = vmatpush1.msra.mxu0 %v87
    %132 = vmatprep.subr.mxu0 0.0
    %133 = vmatpush1.msra.mxu0 %v86
    %134 = vmatprep.subr.mxu0 0.0
    %135 = vmatpush2.msra.mxu0 0.0
    %136 = vmatprep.subr.mxu0 0.0
    %137 = vmatpush2.msra.mxu0 0.0
    %138 = vmatprep.subr.mxu0 0.0
    %139 = vmatpush2.msra.mxu0 0.0
    %140 = vmatprep.subr.mxu0 0.0
    %141 = vmatpush2.msra.mxu0 0.0
    %142 = vmatprep.subr.mxu0 0.0
    %143 = vmatpush2.msra.mxu0 0.0
    %144 = vmatprep.subr.mxu0 0.0
    %145 = vmatpush2.msra.mxu0 0.0
    %146 = vmatprep.subr.mxu0 0.0
    %147 = vmatpush2.msra.mxu0 0.0
    %148 = vmatprep.subr.mxu0 0.0
    %149 = vmatpush2.msra.mxu0 0.0
    %150 = vmatprep.subr.mxu0 0.0
    %151 = vmatpush2.msra.mxu0 0.0
    %152 = vmatprep.subr.mxu0 0.0
    %153 = vmatpush2.msra.mxu0 0.0
    %154 = vmatprep.subr.mxu0 0.0
    %155 = vmatpush2.msra.mxu0 0.0
    %156 = vmatprep.subr.mxu0 0.0
    %157 = vmatpush2.msra.mxu0 0.0
    %158 = vmatprep.subr.mxu0 0.0
    %159 = vmatpush2.msra.mxu0 0.0
    %160 = vmatprep.subr.mxu0 0.0
    %161 = vmatpush2.msra.mxu0 0.0
    %162 = vmatprep.subr.mxu0 0.0
    %163 = vmatpush2.msra.mxu0 0.0
    %164 = vmatprep.subr.mxu0 0.0
    %165 = vmatpush2.msra.mxu0 0.0
    %166 = vmatprep.mubr.f32.mxu0 0.0
    %167 = vmatmul.mubr.f32.gmra.mxu0 %v84
    %v168 = vpop.f32.mrf.mxu0
    %v169 = vadd.f32 0.0, %v168
    %v170 = vpop.f32.mrf.mxu0
    %171 = vmatprep.mubr.f32.mxu0 0.0
    %172 = vmatmul.mubr.f32.gmra.mxu0 %v85
    %v173 = vpop.f32.mrf.mxu0
    %v174 = vadd.f32 0.0, %v173
    %v175 = vpop.f32.mrf.mxu0
    %176 = vdwg.mxu0
    %v177 = vadd.f32 %v82, %v169
    %v178 = vadd.f32 %v83, %v174
    %179 = vst [vmem:[#allocation2] sm:$0xff] %v177
    %180 = vst [vmem:[#allocation2 + $0x8] sm:$0xff] %v178
    // Predicated region
    $region42: #{tpu_custom_call.1} parent=1 // pred_check
      %p181 = pneg %p76
    $region43: #{tpu_custom_call.1} parent=1 // pred_check_branch
      %183 = sbr.rel (%p181) target = $region45
    $region44: #{tpu_custom_call.1} parent=1 // pred_region
      %v184 = vld [vmem:[#allocation2] sm:$0xff]
      %v185 = vld [vmem:[#allocation2 + $0x8] sm:$0xff]
      %v186 = vld [vmem:[%s2] sm:$0x1]
      %v188 = vlaneseq
      %v189 = vshrl.u32 %v188, 7
      %v190 = vsub.s32 0, %v189
      %v191 = vrot.slane %v186, %v190
      %v193 = vadd.f32 %v184, %v191
      %v194 = vadd.f32 %v185, %v191
      %v195 = vld [vmem:[#allocation8] sm:$0xff]
      %v196 = vld [vmem:[#allocation8 + $0x8] sm:$0xff]
      %v197 = vmul.f32 %v195, %v193
      %v198 = vmul.f32 %v196, %v194
      %v199 = vld [vmem:[#allocation9] sm:$0xff]
      %v200 = vld [vmem:[#allocation9 + $0x8] sm:$0xff]
      %v201 = vadd.f32 %v197, %v199
      %v202 = vadd.f32 %v198, %v200
      %203 = vst [vmem:[#allocation11] sm:$0xff] %v201
      %204 = vst [vmem:[#allocation11 + $0x8] sm:$0xff] %v202
    $region45: #{tpu_custom_call.1} parent=1 // pred_fallthru
      _
    // Predicated region
    $region46: #{tpu_custom_call.1} parent=1 // pred_check
      _
    $region47: #{tpu_custom_call.1} parent=1 // pred_check_branch
      %206 = sbr.rel (0) target = $region49
    $region48: #{tpu_custom_call.1} parent=1 // pred_region
      %s208 = ssub.s32 256, 256
      %209 = vsyncadd [#allocation5], %s208
      %s210 = sshll.u32 [#allocation11], 4
      %s211 = int_to_ptr.vmem [resolvable:$true] %s210
      %216 = dma.vmem_to_hbm [thread:$0]  %s211, 256, %s5, [#allocation5], 128, 128, 8
    $region49: #{tpu_custom_call.1} parent=1 // pred_fallthru
      _
    // Predicated region
    $region50: #{tpu_custom_call.1} parent=1 // pred_check
      _
    $region51: #{tpu_custom_call.1} parent=1 // pred_check_branch
      %218 = sbr.rel (0) target = $region53
    $region52: #{tpu_custom_call.1} parent=1 // pred_region
      %219 = dma.done [#allocation5], 256
    $region53: #{tpu_custom_call.1} parent=1 // pred_fallthru
      _
    %220 = vsyncpa [#allocation4], 1
    %221 = vsyncpa [#allocation7], 1
    %222 = vsyncpa [#allocation10], 1
    %223 = vsyncpa [#allocation5], 1

</llo_original>
